<compile_context>
chip_gen: v5e
topology: v5e:2x2
jax: 0.10.0
libtpu: 0.0.40
codegen_flags: <defaults>
</compile_context>

<pallas_src>
import jax
import jax.numpy as jnp
from jax.experimental import pallas as pl
from jax.experimental.pallas import tpu as pltpu


def valuenet_kernel(xT_ref, w1T_ref, b1_ref, w2T_ref, b2_ref, w3_ref, b3_ref, oT_ref):
    # Layer 1: (H, S_pad) @ (S_pad, tile_b) -> (H, tile_b), bf16 MXU, fp32 acc.
    h1 = jnp.tanh(
        jnp.dot(w1T_ref[...], xT_ref[...], preferred_element_type=jnp.float32)
        + b1_ref[...]
    )
    # Layer 2: (H, H) @ (H, tile_b) -> (H, tile_b)
    h2 = jnp.tanh(
        jnp.dot(w2T_ref[...], h1.astype(w2T_ref.dtype),
                preferred_element_type=jnp.float32)
        + b2_ref[...]
    )
    # Layer 3: (H,1) weight column -> VPU multiply + XLU sublane reduce (avoids M=1 matmul).
    oT_ref[...] = (
        jnp.sum(h2 * w3_ref[...], axis=0, keepdims=True) + b3_ref[...]
    ).astype(oT_ref.dtype)


def pack_valuenet_params(params, *, compute_dtype=jnp.bfloat16):
    """One-time packing of ValueNet params for the transposed kernel.

    Call once and cache the result; do NOT rebuild per forward call.
    Weights arrive as (in_features, out_features), biases as (1, out_features).
    """
    S, H = params["w1"].shape
    s_pad = max(8, ((S + 7) // 8) * 8)  # K-align layer-1 contraction dim

    w1T = jnp.zeros((H, s_pad), compute_dtype)
    w1T = w1T.at[:, :S].set(params["w1"].T.astype(compute_dtype))   # (H, S_pad)
    w2T = params["w2"].T.astype(compute_dtype)                      # (H, H)
    b1 = params["b1"].reshape(H, 1).astype(jnp.float32)             # (H, 1)
    b2 = params["b2"].reshape(H, 1).astype(jnp.float32)             # (H, 1)
    w3 = params["w3"].reshape(H, 1).astype(jnp.float32)             # (H, 1)
    b3 = params["b3"].reshape(1, 1).astype(jnp.float32)             # (1, 1)
    return {"w1T": w1T, "b1": b1, "w2T": w2T, "b2": b2, "w3": w3, "b3": b3,
            "S": S, "S_pad": s_pad, "H": H}


def _pick_tile(B, tile_rows):
    """Lane-dense batch tile: multiple of 128 dividing B, >=2 grid steps when possible."""
    if B % 128 != 0 or B < 256:
        return B  # single full-array block (small / odd batches)
    tile_b = min(tile_rows, B // 2)            # >=2 steps -> both v7x TCs get work
    tile_b = max(128, (tile_b // 128) * 128)   # lane-dense
    while B % tile_b != 0:                     # exact division (B % 128 == 0 guarantees exit)
        tile_b -= 128
    return tile_b


def valuenet_forward(x, packed, *, tile_rows=8192):
    """x: (B, state_dim) float32. packed: output of pack_valuenet_params."""
    B, S = x.shape
    assert S == packed["S"], "state_dim mismatch with packed params"
    H, s_pad = packed["H"], packed["S_pad"]
    cdt = packed["w1T"].dtype

    # Lane-dense bf16 input slab (S_pad, B); transpose+pad+cast fuse into one XLA pass over x.
    xT = jnp.pad(x.T.astype(cdt), ((0, s_pad - S), (0, 0)))

    tile_b = _pick_tile(B, tile_rows)
    grid = (B // tile_b,)

    tiled = lambda i: (0, i)      # xT / oT: walk batch tiles along the lane axis
    resident = lambda i: (0, 0)   # weights/biases: same block every step -> stay in VMEM

    oT = pl.pallas_call(
        valuenet_kernel,
        out_shape=jax.ShapeDtypeStruct((1, B), jnp.float32),
        grid=grid,
        in_specs=[
            pl.BlockSpec((s_pad, tile_b), tiled),   # xT        (bf16)
            pl.BlockSpec((H, s_pad), resident),     # W1^T      (bf16)
            pl.BlockSpec((H, 1), resident),         # b1        (f32)
            pl.BlockSpec((H, H), resident),         # W2^T      (bf16)
            pl.BlockSpec((H, 1), resident),         # b2        (f32)
            pl.BlockSpec((H, 1), resident),         # w3 column (f32)
            pl.BlockSpec((1, 1), resident),         # b3        (f32)
        ],
        out_specs=pl.BlockSpec((1, tile_b), tiled),
        compiler_params=pltpu.CompilerParams(
            dimension_semantics=("parallel",),  # shard batch tiles across v7x's 2 TCs
        ),
    )(xT, packed["w1T"], packed["b1"], packed["w2T"], packed["b2"],
      packed["w3"], packed["b3"])

    # (1, B) -> (B, 1): free row-major reshape of B contiguous values.
    return oT.reshape(B, 1)


def init_valuenet_params(key, state_dim, hidden_dim):
    """Deterministic init mimicking PyTorch default Linear init."""
    k = jax.random.split(key, 6)

    def lin(kw, kb, fan_in, fan_out):
        bound = 1.0 / jnp.sqrt(jnp.float32(fan_in))
        w = jax.random.uniform(kw, (fan_in, fan_out), jnp.float32, -bound, bound)
        b = jax.random.uniform(kb, (1, fan_out), jnp.float32, -bound, bound)
        return w, b

    w1, b1 = lin(k[0], k[1], state_dim, hidden_dim)
    w2, b2 = lin(k[2], k[3], hidden_dim, hidden_dim)
    w3, b3 = lin(k[4], k[5], hidden_dim, 1)
    return {"w1": w1, "b1": b1, "w2": w2, "b2": b2, "w3": w3, "b3": b3}


def valuenet_ref(x, params):
    """Pure-JAX fp32 reference for correctness check."""
    h1 = jnp.tanh(x @ params["w1"] + params["b1"])
    h2 = jnp.tanh(h1 @ params["w2"] + params["b2"])
    return h2 @ params["w3"] + params["b3"]


if __name__ == "__main__":
    key = jax.random.PRNGKey(0)
    k_param, k_x1, k_x2 = jax.random.split(key, 3)

    batch, state_dim, hidden_dim = 64, 4, 32
    params = init_valuenet_params(k_param, state_dim, hidden_dim)
    packed = pack_valuenet_params(params)  # one-time packing; reuse across calls

    # Small batch: single full-array block, grid=(1,).
    x = jax.random.normal(k_x1, (batch, state_dim), jnp.float32)
    out = jax.block_until_ready(valuenet_forward(x, packed))
    ref = valuenet_ref(x, params)
    assert out.shape == (batch, 1)
    # bf16 MXU operands (fp32 accumulation) -> relaxed parity vs fp32 reference.
    assert jnp.allclose(out, ref, atol=2e-2, rtol=2e-2), "mismatch vs reference (small batch)"

    # Larger batch: exercises the lane-dense batch-tiled pipeline (grid=(4,)),
    # resident weights + moving xT/oT blocks.
    x2 = jax.random.normal(k_x2, (512, state_dim), jnp.float32)
    out2 = jax.block_until_ready(valuenet_forward(x2, packed, tile_rows=128))
    ref2 = valuenet_ref(x2, params)
    assert out2.shape == (512, 1)
    assert jnp.allclose(out2, ref2, atol=2e-2, rtol=2e-2), "mismatch vs reference (tiled batch)"

    print("KERNEL_OK")
</pallas_src>

<mosaic_0001>
module attributes {stable_mosaic.version = 11 : i64} {
  func.func @valuenet_kernel(%arg0: i32, %arg1: memref<8x64xbf16, #tpu.memory_space<vmem>>, %arg2: memref<32x8xbf16, #tpu.memory_space<vmem>>, %arg3: memref<32x1xf32, #tpu.memory_space<vmem>>, %arg4: memref<32x32xbf16, #tpu.memory_space<vmem>>, %arg5: memref<32x1xf32, #tpu.memory_space<vmem>>, %arg6: memref<32x1xf32, #tpu.memory_space<vmem>>, %arg7: memref<1x1xf32, #tpu.memory_space<vmem>>, %arg8: memref<1x64xf32, #tpu.memory_space<vmem>>) attributes {dimension_semantics = [#tpu.dimension_semantics<parallel>], iteration_bounds = array<i64: 1>, scalar_prefetch = 0 : i64, scratch_operands = 0 : i64, tpu.core_type = #tpu.core_type<tc>, window_params = [{transform_indices = @transform_0, window_bounds = array<i64: 8, 64>}, {pipeline_mode = #tpu.pipeline_mode<synchronous>, transform_indices = @transform_1, window_bounds = array<i64: 32, 8>}, {pipeline_mode = #tpu.pipeline_mode<synchronous>, transform_indices = @transform_2, window_bounds = array<i64: 32, 1>}, {pipeline_mode = #tpu.pipeline_mode<synchronous>, transform_indices = @transform_3, window_bounds = array<i64: 32, 32>}, {pipeline_mode = #tpu.pipeline_mode<synchronous>, transform_indices = @transform_4, window_bounds = array<i64: 32, 1>}, {pipeline_mode = #tpu.pipeline_mode<synchronous>, transform_indices = @transform_5, window_bounds = array<i64: 32, 1>}, {pipeline_mode = #tpu.pipeline_mode<synchronous>, transform_indices = @transform_6, window_bounds = array<i64: 1, 1>}, {transform_indices = @transform_7, window_bounds = array<i64: 1, 64>}]} {
    %c0 = arith.constant 0 : index
    %c0_0 = arith.constant 0 : index
    %0 = vector.load %arg2[%c0, %c0_0] : memref<32x8xbf16, #tpu.memory_space<vmem>>, vector<32x8xbf16>
    %c0_1 = arith.constant 0 : index
    %c0_2 = arith.constant 0 : index
    %1 = vector.load %arg1[%c0_1, %c0_2] : memref<8x64xbf16, #tpu.memory_space<vmem>>, vector<8x64xbf16>
    %cst = arith.constant dense<0.000000e+00> : vector<32x64xf32>
    %2 = tpu.matmul %0, %1, %cst {dimension_numbers = #tpu.dot_dimension_numbers<[1], [0], [0], [1], [0, 0, 1, 1], [], []>} : vector<32x8xbf16>, vector<8x64xbf16>, vector<32x64xf32> -> vector<32x64xf32>
    %c0_3 = arith.constant 0 : index
    %c0_4 = arith.constant 0 : index
    %3 = vector.load %arg3[%c0_3, %c0_4] : memref<32x1xf32, #tpu.memory_space<vmem>>, vector<32x1xf32>
    %4 = vector.broadcast %3 : vector<32x1xf32> to vector<32x64xf32>
    %5 = arith.addf %2, %4 : vector<32x64xf32>
    %6 = math.tanh %5 : vector<32x64xf32>
    %c0_5 = arith.constant 0 : index
    %c0_6 = arith.constant 0 : index
    %7 = vector.load %arg4[%c0_5, %c0_6] : memref<32x32xbf16, #tpu.memory_space<vmem>>, vector<32x32xbf16>
    %8 = arith.truncf %6 : vector<32x64xf32> to vector<32x64xbf16>
    %cst_7 = arith.constant dense<0.000000e+00> : vector<32x64xf32>
    %9 = tpu.matmul %7, %8, %cst_7 {dimension_numbers = #tpu.dot_dimension_numbers<[1], [0], [0], [1], [0, 0, 1, 1], [], []>} : vector<32x32xbf16>, vector<32x64xbf16>, vector<32x64xf32> -> vector<32x64xf32>
    %c0_8 = arith.constant 0 : index
    %c0_9 = arith.constant 0 : index
    %10 = vector.load %arg5[%c0_8, %c0_9] : memref<32x1xf32, #tpu.memory_space<vmem>>, vector<32x1xf32>
    %11 = vector.broadcast %10 : vector<32x1xf32> to vector<32x64xf32>
    %12 = arith.addf %9, %11 : vector<32x64xf32>
    %13 = math.tanh %12 : vector<32x64xf32>
    %c0_10 = arith.constant 0 : index
    %c0_11 = arith.constant 0 : index
    %14 = vector.load %arg6[%c0_10, %c0_11] : memref<32x1xf32, #tpu.memory_space<vmem>>, vector<32x1xf32>
    %15 = vector.broadcast %14 : vector<32x1xf32> to vector<32x64xf32>
    %16 = arith.mulf %13, %15 : vector<32x64xf32>
    %cst_12 = arith.constant dense<0.000000e+00> : vector<64xf32>
    %17 = vector.multi_reduction <add>, %16, %cst_12 [0] : vector<32x64xf32> to vector<64xf32>
    %18 = vector.shape_cast %17 : vector<64xf32> to vector<1x64xf32>
    %c0_13 = arith.constant 0 : index
    %c0_14 = arith.constant 0 : index
    %19 = vector.load %arg7[%c0_13, %c0_14] : memref<1x1xf32, #tpu.memory_space<vmem>>, vector<1x1xf32>
    %20 = vector.broadcast %19 : vector<1x1xf32> to vector<1x64xf32>
    %21 = arith.addf %18, %20 : vector<1x64xf32>
    %c0_15 = arith.constant 0 : index
    %c0_16 = arith.constant 0 : index
    %22 = vector.load %arg8[%c0_15, %c0_16] : memref<1x64xf32, #tpu.memory_space<vmem>>, vector<1x64xf32>
    tpu.vector_store %arg8[%c0_15, %c0_16], %21 {strides = array<i32>} : memref<1x64xf32, #tpu.memory_space<vmem>>, vector<1x64xf32>,
    return
  }
  func.func @transform_0(%arg0: i32) -> (i32, i32) {
    %c0_i32 = arith.constant 0 : i32
    %c0_i32_0 = arith.constant 0 : i32
    return %c0_i32, %arg0 : i32, i32
  }
  func.func @transform_1(%arg0: i32) -> (i32, i32) {
    %c0_i32 = arith.constant 0 : i32
    %c0_i32_0 = arith.constant 0 : i32
    %c0_i32_1 = arith.constant 0 : i32
    return %c0_i32, %c0_i32_0 : i32, i32
  }
  func.func @transform_2(%arg0: i32) -> (i32, i32) {
    %c0_i32 = arith.constant 0 : i32
    %c0_i32_0 = arith.constant 0 : i32
    %c0_i32_1 = arith.constant 0 : i32
    return %c0_i32, %c0_i32_0 : i32, i32
  }
  func.func @transform_3(%arg0: i32) -> (i32, i32) {
    %c0_i32 = arith.constant 0 : i32
    %c0_i32_0 = arith.constant 0 : i32
    %c0_i32_1 = arith.constant 0 : i32
    return %c0_i32, %c0_i32_0 : i32, i32
  }
  func.func @transform_4(%arg0: i32) -> (i32, i32) {
    %c0_i32 = arith.constant 0 : i32
    %c0_i32_0 = arith.constant 0 : i32
    %c0_i32_1 = arith.constant 0 : i32
    return %c0_i32, %c0_i32_0 : i32, i32
  }
  func.func @transform_5(%arg0: i32) -> (i32, i32) {
    %c0_i32 = arith.constant 0 : i32
    %c0_i32_0 = arith.constant 0 : i32
    %c0_i32_1 = arith.constant 0 : i32
    return %c0_i32, %c0_i32_0 : i32, i32
  }
  func.func @transform_6(%arg0: i32) -> (i32, i32) {
    %c0_i32 = arith.constant 0 : i32
    %c0_i32_0 = arith.constant 0 : i32
    %c0_i32_1 = arith.constant 0 : i32
    return %c0_i32, %c0_i32_0 : i32, i32
  }
  func.func @transform_7(%arg0: i32) -> (i32, i32) {
    %c0_i32 = arith.constant 0 : i32
    %c0_i32_0 = arith.constant 0 : i32
    return %c0_i32, %arg0 : i32, i32
  }
}

</mosaic_0001>

<llo_original>
// kernel: tpu_custom_call.1
$region0: #{tpu_custom_call.1}
  #allocation0 [shape = 'u32[]', space=smem, size = 0x4, offset = 0x4, fixed_abs, tag = 'smem constant byte address 0x4 - core index']
  #allocation1 [shape = 'u32[72,128]{1,0:T(1,128)}', space=vmem, size = 0x9000, scoped, tag = 'internal scratch']
  #allocation2 [shape = 'f32[1,1]{1,0:T(1,128)S(1)}', space=vmem, size = 0x200, scoped, tag = 'scoped memory for tpu_custom_call.1']
  %s0 = inlined_call_operand.vmem [shape: bf16[8,64], index: 0, kind: input, shape index: {}]
  %s1 = inlined_call_operand.vmem [shape: bf16[32,8], index: 1, kind: input, shape index: {}]
  %s2 = inlined_call_operand.vmem [shape: f32[32,1], index: 2, kind: input, shape index: {}]
  %s3 = inlined_call_operand.vmem [shape: bf16[32,32], index: 3, kind: input, shape index: {}]
  %s4 = inlined_call_operand.vmem [shape: f32[32,1], index: 4, kind: input, shape index: {}]
  %s5 = inlined_call_operand.vmem [shape: f32[32,1], index: 5, kind: input, shape index: {}]
  %s6 = inlined_call_operand.<no memory space> [shape: f32[1,1], index: 6, kind: input, shape index: {}]
  %s7 = inlined_call_operand.hbm [shape: f32[1,64], index: 7, kind: output, shape index: {}]
  %s8 = sld [smem:[#allocation0]]
  $region38: #{tpu_custom_call.1} parent=0
    _
  %s10 = ssub.s32 1, %s8
  %s11 = scalar_select 0, %s10, %s8
  %v12 = vstv %s6
  %13 = vst [vmem:[#allocation2] sm:$0x1] %v12
  $region1: #{tpu_custom_call.1} parent=0
    #allocation3 [shape = 'u8[512]{0}', space=vmem, size = 0x400, scoped, tag = 'output window, operand 0, single buffered']
    #allocation4 [shape = 's32[1]{0}', space=sflag, size = 0x4, scoped, tag = 'scoped memory for tpu_custom_call.1']
    %14 = vsyncpa [#allocation4], 0
    // Predicated region
    $region2: #{tpu_custom_call.1} parent=1 // pred_check
      _
    $region3: #{tpu_custom_call.1} parent=1 // pred_check_branch
      %16 = sbr.rel (0) target = $region5
    $region4: #{tpu_custom_call.1} parent=1 // pred_region
      _
    $region5: #{tpu_custom_call.1} parent=1 // pred_fallthru
      _
    // Predicated region
    $region6: #{tpu_custom_call.1} parent=1 // pred_check
      _
    $region7: #{tpu_custom_call.1} parent=1 // pred_check_branch
      %18 = sbr.rel (0) target = $region9
    $region8: #{tpu_custom_call.1} parent=1 // pred_region
      _
    $region9: #{tpu_custom_call.1} parent=1 // pred_fallthru
      _
    // Predicated region
    $region10: #{tpu_custom_call.1} parent=1 // pred_check
      _
    $region11: #{tpu_custom_call.1} parent=1 // pred_check_branch
      %20 = sbr.rel (0) target = $region13
    $region12: #{tpu_custom_call.1} parent=1 // pred_region
      _
    $region13: #{tpu_custom_call.1} parent=1 // pred_fallthru
      _
    // Predicated region
    $region14: #{tpu_custom_call.1} parent=1 // pred_check
      _
    $region15: #{tpu_custom_call.1} parent=1 // pred_check_branch
      %22 = sbr.rel (0) target = $region17
    $region16: #{tpu_custom_call.1} parent=1 // pred_region
      _
    $region17: #{tpu_custom_call.1} parent=1 // pred_fallthru
      _
    // Predicated region
    $region18: #{tpu_custom_call.1} parent=1 // pred_check
      _
    $region19: #{tpu_custom_call.1} parent=1 // pred_check_branch
      %24 = sbr.rel (0) target = $region21
    $region20: #{tpu_custom_call.1} parent=1 // pred_region
      _
    $region21: #{tpu_custom_call.1} parent=1 // pred_fallthru
      _
    // Predicated region
    $region22: #{tpu_custom_call.1} parent=1 // pred_check
      _
    $region23: #{tpu_custom_call.1} parent=1 // pred_check_branch
      %26 = sbr.rel (0) target = $region25
    $region24: #{tpu_custom_call.1} parent=1 // pred_region
      _
    $region25: #{tpu_custom_call.1} parent=1 // pred_fallthru
      _
    // Predicated region
    $region26: #{tpu_custom_call.1} parent=1 // pred_check
      _
    $region27: #{tpu_custom_call.1} parent=1 // pred_check_branch
      %28 = sbr.rel (0) target = $region29
    $region28: #{tpu_custom_call.1} parent=1 // pred_region
      _
    $region29: #{tpu_custom_call.1} parent=1 // pred_fallthru
      _
    %v30 = vld [vmem:[%s1] sm:$0xf]
    %v31 = vld [vmem:[%s1 + $0x4] sm:$0xf]
    %v32 = vld [vmem:[%s1 + $0x8] sm:$0xf]
    %v33 = vld [vmem:[%s1 + $0xc] sm:$0xf]
    %v34 = vld [vmem:[%s0] sm:$0xf]
    %v35 = vld [vmem:[%s2] sm:$0xff]
    %v36 = vld [vmem:[%s2 + $0x8] sm:$0xff]
    %v37 = vld [vmem:[%s2 + $0x10] sm:$0xff]
    %v38 = vld [vmem:[%s2 + $0x18] sm:$0xff]
    %40 = vset.pattern.permute.xlu0 0
    %41 = vperm.xlu0 %40, %v35
    %v42 = vpop.permute.xlu0 %41
    %45 = vset.pattern.permute.xlu0 0
    %46 = vperm.xlu0 %45, %v36
    %v47 = vpop.permute.xlu0 %46
    %50 = vset.pattern.permute.xlu0 0
    %51 = vperm.xlu0 %50, %v37
    %v52 = vpop.permute.xlu0 %51
    %55 = vset.pattern.permute.xlu0 0
    %56 = vperm.xlu0 %55, %v38
    %v57 = vpop.permute.xlu0 %56
    %v63 = vunpack.c.l.b16 %v30
    %v64 = vunpack.c.l.b16 %v31
    %v65 = vunpack.c.l.b16 %v32
    %v66 = vunpack.c.l.b16 %v33
    %v67 = vpack.c.b16 %v64, %v63
    %v68 = vpack.c.b16 %v66, %v65
    %vm69 = vcmask 64512
    %v71 = vsel %vm69, %v67, 0
    %v74 = vsel %vm69, %v68, 0
    %vm76 = vcmask 1043456
    %v78 = vsel %vm76, %v34, 0
    %80 = vmatpush.bf16.msra.mxu0 0
    %81 = vmatpush.bf16.msra.mxu0 0
    %82 = vmatpush.bf16.msra.mxu0 0
    %83 = vmatpush.bf16.msra.mxu0 0
    %84 = vmatpush.bf16.msra.mxu0 0
    %85 = vmatpush.bf16.msra.mxu0 0
    %86 = vmatpush.bf16.msra.mxu0 0
    %87 = vmatpush.bf16.msra.mxu0 %v78
    %88 = vmatmul.bf16.gmra.mxu0 %v71
    %v89 = vpop.f32.mrf.mxu0
    %v90 = vadd.f32 %v42, %v89
    %v91 = vpop.f32.mrf.mxu0
    %v92 = vadd.f32 %v47, %v91
    %93 = vmatmul.bf16.gmra.mxu0 %v74
    %v94 = vpop.f32.mrf.mxu0
    %v95 = vadd.f32 %v52, %v94
    %v96 = vpop.f32.mrf.mxu0
    %v97 = vadd.f32 %v57, %v96
    %98 = vdwg.mxu0
    %v99 = vtanh.pop %v90
    %v100 = vtanh.pop %v92
    %v101 = vtanh.pop %v95
    %v102 = vtanh.pop %v97
    %v103 = vld [vmem:[%s3] sm:$0xf]
    %v104 = vld [vmem:[%s3 + $0x4] sm:$0xf]
    %v105 = vld [vmem:[%s3 + $0x8] sm:$0xf]
    %v106 = vld [vmem:[%s3 + $0xc] sm:$0xf]
    %v107 = vpack.c.bf16 %v100, %v99
    %v108 = vpack.c.bf16 %v102, %v101
    %v109 = vld [vmem:[%s4] sm:$0xff]
    %v110 = vld [vmem:[%s4 + $0x8] sm:$0xff]
    %v111 = vld [vmem:[%s4 + $0x10] sm:$0xff]
    %v112 = vld [vmem:[%s4 + $0x18] sm:$0xff]
    %114 = vset.pattern.permute.xlu0 0
    %115 = vperm.xlu0 %114, %v109
    %v116 = vpop.permute.xlu0 %115
    %119 = vset.pattern.permute.xlu0 0
    %120 = vperm.xlu0 %119, %v110
    %v121 = vpop.permute.xlu0 %120
    %124 = vset.pattern.permute.xlu0 0
    %125 = vperm.xlu0 %124, %v111
    %v126 = vpop.permute.xlu0 %125
    %129 = vset.pattern.permute.xlu0 0
    %130 = vperm.xlu0 %129, %v112
    %v131 = vpop.permute.xlu0 %130
    %v137 = vunpack.c.l.b16 %v103
    %v138 = vunpack.c.l.b16 %v104
    %v139 = vunpack.c.l.b16 %v105
    %v140 = vunpack.c.l.b16 %v106
    %v141 = vpack.c.b16 %v138, %v137
    %v142 = vpack.c.b16 %v140, %v139
    %vm143 = vcmask 261120
    %v145 = vsel %vm143, %v141, 0
    %v148 = vsel %vm143, %v142, 0
    %150 = vmatpush.bf16.msra.mxu0 0
    %151 = vmatpush.bf16.msra.mxu0 0
    %152 = vmatpush.bf16.msra.mxu0 0
    %153 = vmatpush.bf16.msra.mxu0 0
    %154 = vmatpush.bf16.msra.mxu0 0
    %155 = vmatpush.bf16.msra.mxu0 0
    %156 = vmatpush.bf16.msra.mxu0 %v108
    %157 = vmatpush.bf16.msra.mxu0 %v107
    %158 = vmatmul.bf16.gmra.mxu0 %v145
    %v159 = vpop.f32.mrf.mxu0
    %v160 = vadd.f32 %v116, %v159
    %v161 = vpop.f32.mrf.mxu0
    %v162 = vadd.f32 %v121, %v161
    %163 = vmatmul.bf16.gmra.mxu0 %v148
    %v164 = vpop.f32.mrf.mxu0
    %v165 = vadd.f32 %v126, %v164
    %v166 = vpop.f32.mrf.mxu0
    %v167 = vadd.f32 %v131, %v166
    %168 = vdwg.mxu0
    %v169 = vtanh.pop %v160
    %v170 = vtanh.pop %v162
    %v171 = vtanh.pop %v165
    %v172 = vtanh.pop %v167
    %v173 = vld [vmem:[%s5] sm:$0xff]
    %v174 = vld [vmem:[%s5 + $0x8] sm:$0xff]
    %v175 = vld [vmem:[%s5 + $0x10] sm:$0xff]
    %v176 = vld [vmem:[%s5 + $0x18] sm:$0xff]
    %178 = vset.pattern.permute.xlu0 0
    %179 = vperm.xlu0 %178, %v173
    %v180 = vpop.permute.xlu0 %179
    %183 = vset.pattern.permute.xlu0 0
    %184 = vperm.xlu0 %183, %v174
    %v185 = vpop.permute.xlu0 %184
    %188 = vset.pattern.permute.xlu0 0
    %189 = vperm.xlu0 %188, %v175
    %v190 = vpop.permute.xlu0 %189
    %193 = vset.pattern.permute.xlu0 0
    %194 = vperm.xlu0 %193, %v176
    %v195 = vpop.permute.xlu0 %194
    %v197 = vmul.f32 %v169, %v180
    %v198 = vmul.f32 %v170, %v185
    %v199 = vmul.f32 %v171, %v190
    %v200 = vmul.f32 %v172, %v195
    %vm201 = vcmask 523264
    %v202 = vsel %vm201, %v197, 0.0
    %v203 = vsel %vm201, %v198, 0.0
    %v204 = vadd.f32 %v202, %v203
    %v205 = vsel %vm201, %v199, 0.0
    %v206 = vadd.f32 %v204, %v205
    %v207 = vsel %vm201, %v200, 0.0
    %v208 = vadd.f32 %v206, %v207
    %v209 = vrot.slane %v208, 4
    %v210 = vadd.f32 %v208, %v209
    %v211 = vrot.slane %v210, 2
    %v212 = vadd.f32 %v210, %v211
    %v213 = vrot.slane %v212, 1
    %v214 = vadd.f32 %v212, %v213
    %v215 = vld [vmem:[#allocation2] sm:$0x1]
    %217 = vset.pattern.permute.xlu0 0
    %218 = vperm.xlu0 %217, %v215
    %v219 = vpop.permute.xlu0 %218
    %v221 = vperm.slane %v219, 0
    %v222 = vadd.f32 %v214, %v221
    %vm223 = vcmask 516096
    %224 = vst.msk [vmem:[#allocation3] sm:$0x1] %vm223, %v222
    // Predicated region
    $region30: #{tpu_custom_call.1} parent=1 // pred_check
      _
    $region31: #{tpu_custom_call.1} parent=1 // pred_check_branch
      %226 = sbr.rel (0) target = $region33
    $region32: #{tpu_custom_call.1} parent=1 // pred_region
      %228 = vsyncadd [#allocation4], 0
      %s230 = sshll.u32 [#allocation3], 4
      %s231 = int_to_ptr.vmem [resolvable:$true] %s230
      %s232 = sshll.u32 %s7, 4
      %s233 = int_to_ptr.hbm [resolvable:$true] %s232
      %235 = dma.vmem_to_hbm [thread:$0]  %s231, 16, %s233, [#allocation4]
    $region33: #{tpu_custom_call.1} parent=1 // pred_fallthru
      _
    // Predicated region
    $region34: #{tpu_custom_call.1} parent=1 // pred_check
      _
    $region35: #{tpu_custom_call.1} parent=1 // pred_check_branch
      %237 = sbr.rel (0) target = $region37
    $region36: #{tpu_custom_call.1} parent=1 // pred_region
      %239 = dma.done [#allocation4], 16
    $region37: #{tpu_custom_call.1} parent=1 // pred_fallthru
      _
    %240 = vsyncpa [#allocation4], 1

</llo_original>
